<compile_context>
chip_gen: v7x
topology: tpu7x:2x2x1
jax: 0.10.0
libtpu: 0.0.40
codegen_flags: <defaults>
</compile_context>

<pallas_src>
import functools

import jax
import jax.numpy as jnp
from jax.experimental import pallas as pl
from jax.experimental.pallas import tpu as pltpu

HIDDEN = 256
LANE = 128


def _dqn_kernel(x_ref, w1_ref, b1_ref, w2_ref, b2_ref, w3_ref, b3_ref,
                w4_ref, b4_ref, o_ref):
    # layer1 + relu  (bf16 into the MXU, f32 accumulate, f32 bias/ReLU on VPU)
    h = jnp.dot(x_ref[...].astype(jnp.bfloat16), w1_ref[...],
                preferred_element_type=jnp.float32)
    h = jnp.maximum(h + b1_ref[...], 0.0)
    # layer2 + relu
    h = jnp.dot(h.astype(jnp.bfloat16), w2_ref[...],
                preferred_element_type=jnp.float32)
    h = jnp.maximum(h + b2_ref[...], 0.0)
    # layer3 + relu
    h = jnp.dot(h.astype(jnp.bfloat16), w3_ref[...],
                preferred_element_type=jnp.float32)
    h = jnp.maximum(h + b3_ref[...], 0.0)
    # layer4 (no activation) -> lane-dense padded output block
    out = jnp.dot(h.astype(jnp.bfloat16), w4_ref[...],
                  preferred_element_type=jnp.float32)
    o_ref[...] = (out + b4_ref[...]).astype(o_ref.dtype)


def prepare_params(params, weight_dtype=jnp.bfloat16):
    """One-time relayout (call once, outside the per-step forward):
    transpose nn.Linear weights (out,in)->(in,out), cast weights to bf16,
    keep biases f32 as (1,out), and zero-pad the final layer to a lane-dense
    output width (multiple of 128)."""
    n_actions = params["w4"].shape[0]
    n_out_pad = max(LANE, -(-n_actions // LANE) * LANE)

    w4 = jnp.zeros((HIDDEN, n_out_pad), weight_dtype)
    w4 = w4.at[:, :n_actions].set(params["w4"].T.astype(weight_dtype))
    b4 = jnp.zeros((1, n_out_pad), jnp.float32)
    b4 = b4.at[:, :n_actions].set(params["b4"].reshape(1, -1).astype(jnp.float32))

    prep = {
        "w1": params["w1"].T.astype(weight_dtype),
        "b1": params["b1"].reshape(1, -1).astype(jnp.float32),
        "w2": params["w2"].T.astype(weight_dtype),
        "b2": params["b2"].reshape(1, -1).astype(jnp.float32),
        "w3": params["w3"].T.astype(weight_dtype),
        "b3": params["b3"].reshape(1, -1).astype(jnp.float32),
        "w4": w4,
        "b4": b4,
    }
    return jax.tree_util.tree_map(jnp.asarray, prep), n_actions


def _round_up(x, m):
    return ((x + m - 1) // m) * m


def _num_tensorcores():
    """Best-effort TensorCore count of the local chip (v7x has 2, v5e/v6e 1)."""
    try:
        kind = jax.devices()[0].device_kind.lower()
        return 2 if "v7" in kind else 1
    except Exception:  # pragma: no cover - defensive, CPU/interpret fallbacks
        return 1


def _choose_tb(B, block_b, n_cores):
    """Batch-tile selection.

    Single-core chips (v5e/v6e): the grid is a serial loop, so never split a
    batch that already fits in one tile; otherwise tile at block_b.
    Dual-core chips (v7x): prefer an even grid length so both TensorCores get
    equal work under dimension_semantics=("parallel",)."""
    if B <= block_b:
        if n_cores > 1 and B > 256:
            return min(block_b, _round_up(pl.cdiv(B, 2), 128))
        return B
    tb = block_b
    if n_cores > 1:
        g = pl.cdiv(B, tb)
        if g % 2:  # avoid leaving one core idle on the tail block
            tb = max(128, _round_up(pl.cdiv(B, g + 1), 128))
    return tb


@functools.partial(jax.jit,
                   static_argnames=("n_actions", "block_b", "out_dtype", "trim"))
def dqn_forward(x, prep, *, n_actions, block_b=512, out_dtype=jnp.bfloat16,
                trim=True):
    """x: (B, n_obs) float32. prep: output of prepare_params().

    Returns (B, n_actions) Q-values (trim=True), or the lane-dense padded
    (B, 128) block (trim=False) so a downstream consumer (argmax / gather) can
    be fused without an extra HBM slicing pass."""
    B, n_obs = x.shape
    n_out_pad = prep["w4"].shape[1]

    n_cores = _num_tensorcores()
    tb = _choose_tb(B, block_b, n_cores)
    grid = (pl.cdiv(B, tb),)

    # Weights/biases are small and grid-invariant -> fully resident, single
    # buffer (constant index_map => fetched once, not re-DMA'd per step).
    def resident(shape):
        return pl.BlockSpec(shape, lambda i: (0, 0),
                            pipeline_mode=pl.Buffered(buffer_count=1))

    out_bytes_per_elem = jnp.dtype(out_dtype).itemsize

    # Advisory cost hint for XLA's scheduler around this kernel.
    flops = 2 * B * (n_obs * HIDDEN + 2 * HIDDEN * HIDDEN + HIDDEN * n_out_pad)
    weight_bytes = 2 * (n_obs * HIDDEN + 2 * HIDDEN * HIDDEN + HIDDEN * n_out_pad)
    bias_bytes = 4 * (3 * HIDDEN + n_out_pad)
    io_bytes = 4 * B * n_obs + out_bytes_per_elem * B * n_out_pad
    cost = pl.CostEstimate(flops=flops, transcendentals=0,
                           bytes_accessed=weight_bytes + bias_bytes + io_bytes)

    out = pl.pallas_call(
        _dqn_kernel,
        out_shape=jax.ShapeDtypeStruct((B, n_out_pad), out_dtype),
        grid_spec=pltpu.PrefetchScalarGridSpec(
            num_scalar_prefetch=0,
            grid=grid,
            in_specs=[
                pl.BlockSpec((tb, n_obs), lambda i: (i, 0)),          # x tile
                resident((n_obs, HIDDEN)), resident((1, HIDDEN)),     # layer1
                resident((HIDDEN, HIDDEN)), resident((1, HIDDEN)),    # layer2
                resident((HIDDEN, HIDDEN)), resident((1, HIDDEN)),    # layer3
                resident((HIDDEN, n_out_pad)), resident((1, n_out_pad)),  # layer4 (lane-padded)
            ],
            out_specs=pl.BlockSpec((tb, n_out_pad), lambda i: (i, 0)),
        ),
        compiler_params=pltpu.CompilerParams(
            dimension_semantics=("parallel",)),
        cost_estimate=cost,
    )(x, prep["w1"], prep["b1"], prep["w2"], prep["b2"],
      prep["w3"], prep["b3"], prep["w4"], prep["b4"])

    if trim:
        # Zero-padded action columns are sliced off.  (Prefer trim=False and
        # slicing at the point of use so XLA fuses it into the consumer.)
        return out[:, :n_actions]
    return out


def init_dqn_params(key, n_observations, n_actions):
    """Deterministic synthetic init matching nn.Linear shapes (weight: (out, in))."""
    dims = [(HIDDEN, n_observations), (HIDDEN, HIDDEN), (HIDDEN, HIDDEN),
            (n_actions, HIDDEN)]
    params = {}
    for idx, (out_d, in_d) in enumerate(dims, start=1):
        key, kw, kb = jax.random.split(key, 3)
        bound = 1.0 / jnp.sqrt(in_d)  # same scale as PyTorch default init
        params[f"w{idx}"] = jax.random.uniform(
            kw, (out_d, in_d), jnp.float32, minval=-bound, maxval=bound)
        params[f"b{idx}"] = jax.random.uniform(
            kb, (out_d,), jnp.float32, minval=-bound, maxval=bound)
    return params


def dqn_reference(x, params, weight_dtype=jnp.float32):
    """Plain-JAX reference replicating the PyTorch forward (optionally with the
    same bf16 quantization of matmul inputs as the kernel)."""
    def lin(h, w, b):
        return jnp.dot(h.astype(weight_dtype), w.T.astype(weight_dtype),
                       preferred_element_type=jnp.float32) + b
    h = jax.nn.relu(lin(x, params["w1"], params["b1"]))
    h = jax.nn.relu(lin(h, params["w2"], params["b2"]))
    h = jax.nn.relu(lin(h, params["w3"], params["b3"]))
    return lin(h, params["w4"], params["b4"])


if __name__ == "__main__":
    key = jax.random.PRNGKey(0)
    n_observations, n_actions = 32, 8

    kparams, kx_small, kx_big = jax.random.split(key, 3)
    params = init_dqn_params(kparams, n_observations, n_actions)
    prep, n_act = prepare_params(params)       # one-time relayout, outside forward

    # --- small-batch path (typical per-step action selection) ---------------
    batch = 16
    x = jax.random.normal(kx_small, (batch, n_observations), jnp.float32)
    out = dqn_forward(x, prep, n_actions=n_act)
    out = jax.block_until_ready(out).astype(jnp.float32)

    ref_q = dqn_reference(x, params, weight_dtype=jnp.bfloat16)   # same quantization
    ref_f = dqn_reference(x, params)                              # full f32 reference
    assert out.shape == (batch, n_actions)
    assert jnp.allclose(out, ref_q, atol=3e-2, rtol=3e-2), "mismatch vs bf16 reference"
    assert float(jnp.max(jnp.abs(out - ref_f))) < 1e-1, "mismatch vs f32 reference"

    # --- multi-tile path (partial last batch tile, exercises the grid) ------
    batch_big = 640
    xb = jax.random.normal(kx_big, (batch_big, n_observations), jnp.float32)
    out_b = dqn_forward(xb, prep, n_actions=n_act)
    out_b = jax.block_until_ready(out_b).astype(jnp.float32)
    ref_b = dqn_reference(xb, params, weight_dtype=jnp.bfloat16)
    assert out_b.shape == (batch_big, n_actions)
    assert jnp.allclose(out_b, ref_b, atol=3e-2, rtol=3e-2), "mismatch (tiled path)"

    print("KERNEL_OK")
</pallas_src>

<mosaic_0001>
module attributes {stable_mosaic.version = 11 : i64} {
  func.func @_dqn_kernel(%arg0: i32, %arg1: memref<16x32xf32, #tpu.memory_space<vmem>>, %arg2: memref<32x256xbf16, #tpu.memory_space<vmem>>, %arg3: memref<1x256xf32, #tpu.memory_space<vmem>>, %arg4: memref<256x256xbf16, #tpu.memory_space<vmem>>, %arg5: memref<1x256xf32, #tpu.memory_space<vmem>>, %arg6: memref<256x256xbf16, #tpu.memory_space<vmem>>, %arg7: memref<1x256xf32, #tpu.memory_space<vmem>>, %arg8: memref<256x128xbf16, #tpu.memory_space<vmem>>, %arg9: memref<1x128xf32, #tpu.memory_space<vmem>>, %arg10: memref<16x128xbf16, #tpu.memory_space<vmem>>) attributes {dimension_semantics = [#tpu.dimension_semantics<parallel>], iteration_bounds = array<i64: 1>, scalar_prefetch = 0 : i64, scratch_operands = 0 : i64, tpu.core_type = #tpu.core_type<tc>, window_params = [{transform_indices = @transform_0, window_bounds = array<i64: 16, 32>}, {pipeline_mode = #tpu.pipeline_mode<synchronous>, transform_indices = @transform_1, window_bounds = array<i64: 32, 256>}, {pipeline_mode = #tpu.pipeline_mode<synchronous>, transform_indices = @transform_2, window_bounds = array<i64: 1, 256>}, {pipeline_mode = #tpu.pipeline_mode<synchronous>, transform_indices = @transform_3, window_bounds = array<i64: 256, 256>}, {pipeline_mode = #tpu.pipeline_mode<synchronous>, transform_indices = @transform_4, window_bounds = array<i64: 1, 256>}, {pipeline_mode = #tpu.pipeline_mode<synchronous>, transform_indices = @transform_5, window_bounds = array<i64: 256, 256>}, {pipeline_mode = #tpu.pipeline_mode<synchronous>, transform_indices = @transform_6, window_bounds = array<i64: 1, 256>}, {pipeline_mode = #tpu.pipeline_mode<synchronous>, transform_indices = @transform_7, window_bounds = array<i64: 256, 128>}, {pipeline_mode = #tpu.pipeline_mode<synchronous>, transform_indices = @transform_8, window_bounds = array<i64: 1, 128>}, {transform_indices = @transform_9, window_bounds = array<i64: 16, 128>}]} {
    %c0 = arith.constant 0 : index
    %c0_0 = arith.constant 0 : index
    %0 = vector.load %arg1[%c0, %c0_0] : memref<16x32xf32, #tpu.memory_space<vmem>>, vector<16x32xf32>
    %1 = arith.truncf %0 : vector<16x32xf32> to vector<16x32xbf16>
    %c0_1 = arith.constant 0 : index
    %c0_2 = arith.constant 0 : index
    %2 = vector.load %arg2[%c0_1, %c0_2] : memref<32x256xbf16, #tpu.memory_space<vmem>>, vector<32x256xbf16>
    %cst = arith.constant dense<0.000000e+00> : vector<16x256xf32>
    %3 = tpu.matmul %1, %2, %cst {dimension_numbers = #tpu.dot_dimension_numbers<[1], [0], [0], [1], [0, 0, 1, 1], [], []>} : vector<16x32xbf16>, vector<32x256xbf16>, vector<16x256xf32> -> vector<16x256xf32>
    %c0_3 = arith.constant 0 : index
    %c0_4 = arith.constant 0 : index
    %4 = vector.load %arg3[%c0_3, %c0_4] : memref<1x256xf32, #tpu.memory_space<vmem>>, vector<1x256xf32>
    %5 = vector.broadcast %4 : vector<1x256xf32> to vector<16x256xf32>
    %6 = arith.addf %3, %5 : vector<16x256xf32>
    %cst_5 = arith.constant 0.000000e+00 : f32
    %7 = vector.broadcast %cst_5 : f32 to vector<16x256xf32>
    %8 = arith.maximumf %6, %7 : vector<16x256xf32>
    %9 = arith.truncf %8 : vector<16x256xf32> to vector<16x256xbf16>
    %c0_6 = arith.constant 0 : index
    %c0_7 = arith.constant 0 : index
    %10 = vector.load %arg4[%c0_6, %c0_7] : memref<256x256xbf16, #tpu.memory_space<vmem>>, vector<256x256xbf16>
    %cst_8 = arith.constant dense<0.000000e+00> : vector<16x256xf32>
    %11 = tpu.matmul %9, %10, %cst_8 {dimension_numbers = #tpu.dot_dimension_numbers<[1], [0], [0], [1], [0, 0, 1, 1], [], []>} : vector<16x256xbf16>, vector<256x256xbf16>, vector<16x256xf32> -> vector<16x256xf32>
    %c0_9 = arith.constant 0 : index
    %c0_10 = arith.constant 0 : index
    %12 = vector.load %arg5[%c0_9, %c0_10] : memref<1x256xf32, #tpu.memory_space<vmem>>, vector<1x256xf32>
    %13 = vector.broadcast %12 : vector<1x256xf32> to vector<16x256xf32>
    %14 = arith.addf %11, %13 : vector<16x256xf32>
    %cst_11 = arith.constant 0.000000e+00 : f32
    %15 = vector.broadcast %cst_11 : f32 to vector<16x256xf32>
    %16 = arith.maximumf %14, %15 : vector<16x256xf32>
    %17 = arith.truncf %16 : vector<16x256xf32> to vector<16x256xbf16>
    %c0_12 = arith.constant 0 : index
    %c0_13 = arith.constant 0 : index
    %18 = vector.load %arg6[%c0_12, %c0_13] : memref<256x256xbf16, #tpu.memory_space<vmem>>, vector<256x256xbf16>
    %cst_14 = arith.constant dense<0.000000e+00> : vector<16x256xf32>
    %19 = tpu.matmul %17, %18, %cst_14 {dimension_numbers = #tpu.dot_dimension_numbers<[1], [0], [0], [1], [0, 0, 1, 1], [], []>} : vector<16x256xbf16>, vector<256x256xbf16>, vector<16x256xf32> -> vector<16x256xf32>
    %c0_15 = arith.constant 0 : index
    %c0_16 = arith.constant 0 : index
    %20 = vector.load %arg7[%c0_15, %c0_16] : memref<1x256xf32, #tpu.memory_space<vmem>>, vector<1x256xf32>
    %21 = vector.broadcast %20 : vector<1x256xf32> to vector<16x256xf32>
    %22 = arith.addf %19, %21 : vector<16x256xf32>
    %cst_17 = arith.constant 0.000000e+00 : f32
    %23 = vector.broadcast %cst_17 : f32 to vector<16x256xf32>
    %24 = arith.maximumf %22, %23 : vector<16x256xf32>
    %25 = arith.truncf %24 : vector<16x256xf32> to vector<16x256xbf16>
    %c0_18 = arith.constant 0 : index
    %c0_19 = arith.constant 0 : index
    %26 = vector.load %arg8[%c0_18, %c0_19] : memref<256x128xbf16, #tpu.memory_space<vmem>>, vector<256x128xbf16>
    %cst_20 = arith.constant dense<0.000000e+00> : vector<16x128xf32>
    %27 = tpu.matmul %25, %26, %cst_20 {dimension_numbers = #tpu.dot_dimension_numbers<[1], [0], [0], [1], [0, 0, 1, 1], [], []>} : vector<16x256xbf16>, vector<256x128xbf16>, vector<16x128xf32> -> vector<16x128xf32>
    %c0_21 = arith.constant 0 : index
    %c0_22 = arith.constant 0 : index
    %28 = vector.load %arg9[%c0_21, %c0_22] : memref<1x128xf32, #tpu.memory_space<vmem>>, vector<1x128xf32>
    %29 = vector.broadcast %28 : vector<1x128xf32> to vector<16x128xf32>
    %30 = arith.addf %27, %29 : vector<16x128xf32>
    %31 = arith.truncf %30 : vector<16x128xf32> to vector<16x128xbf16>
    %c0_23 = arith.constant 0 : index
    %c0_24 = arith.constant 0 : index
    %32 = vector.load %arg10[%c0_23, %c0_24] : memref<16x128xbf16, #tpu.memory_space<vmem>>, vector<16x128xbf16>
    tpu.vector_store %arg10[%c0_23, %c0_24], %31 {strides = array<i32>} : memref<16x128xbf16, #tpu.memory_space<vmem>>, vector<16x128xbf16>,
    return
  }
  func.func @transform_0(%arg0: i32) -> (i32, i32) {
    %c0_i32 = arith.constant 0 : i32
    %c0_i32_0 = arith.constant 0 : i32
    return %arg0, %c0_i32 : i32, i32
  }
  func.func @transform_1(%arg0: i32) -> (i32, i32) {
    %c0_i32 = arith.constant 0 : i32
    %c0_i32_0 = arith.constant 0 : i32
    %c0_i32_1 = arith.constant 0 : i32
    return %c0_i32, %c0_i32_0 : i32, i32
  }
  func.func @transform_2(%arg0: i32) -> (i32, i32) {
    %c0_i32 = arith.constant 0 : i32
    %c0_i32_0 = arith.constant 0 : i32
    %c0_i32_1 = arith.constant 0 : i32
    return %c0_i32, %c0_i32_0 : i32, i32
  }
  func.func @transform_3(%arg0: i32) -> (i32, i32) {
    %c0_i32 = arith.constant 0 : i32
    %c0_i32_0 = arith.constant 0 : i32
    %c0_i32_1 = arith.constant 0 : i32
    return %c0_i32, %c0_i32_0 : i32, i32
  }
  func.func @transform_4(%arg0: i32) -> (i32, i32) {
    %c0_i32 = arith.constant 0 : i32
    %c0_i32_0 = arith.constant 0 : i32
    %c0_i32_1 = arith.constant 0 : i32
    return %c0_i32, %c0_i32_0 : i32, i32
  }
  func.func @transform_5(%arg0: i32) -> (i32, i32) {
    %c0_i32 = arith.constant 0 : i32
    %c0_i32_0 = arith.constant 0 : i32
    %c0_i32_1 = arith.constant 0 : i32
    return %c0_i32, %c0_i32_0 : i32, i32
  }
  func.func @transform_6(%arg0: i32) -> (i32, i32) {
    %c0_i32 = arith.constant 0 : i32
    %c0_i32_0 = arith.constant 0 : i32
    %c0_i32_1 = arith.constant 0 : i32
    return %c0_i32, %c0_i32_0 : i32, i32
  }
  func.func @transform_7(%arg0: i32) -> (i32, i32) {
    %c0_i32 = arith.constant 0 : i32
    %c0_i32_0 = arith.constant 0 : i32
    %c0_i32_1 = arith.constant 0 : i32
    return %c0_i32, %c0_i32_0 : i32, i32
  }
  func.func @transform_8(%arg0: i32) -> (i32, i32) {
    %c0_i32 = arith.constant 0 : i32
    %c0_i32_0 = arith.constant 0 : i32
    %c0_i32_1 = arith.constant 0 : i32
    return %c0_i32, %c0_i32_0 : i32, i32
  }
  func.func @transform_9(%arg0: i32) -> (i32, i32) {
    %c0_i32 = arith.constant 0 : i32
    %c0_i32_0 = arith.constant 0 : i32
    return %arg0, %c0_i32 : i32, i32
  }
}

</mosaic_0001>

<llo_original>
// kernel: dqn_forward.1
$region0: #{dqn_forward.1}
  #allocation0 [shape = 'u32[]', space=smem, size = 0x4, offset = 0x4, fixed_abs, tag = 'smem constant byte address 0x4 - core index']
  #allocation1 [shape = 'u32[144,128]{1,0:T(1,128)}', space=vmem, size = 0x12000, scoped, tag = 'internal scratch']
  %s0 = inlined_call_operand.hbm [shape: f32[16,32], index: 0, kind: input, shape index: {}]
  %s1 = inlined_call_operand.hbm [shape: bf16[32,256], index: 1, kind: input, shape index: {}]
  %s2 = inlined_call_operand.vmem [shape: f32[1,256], index: 2, kind: input, shape index: {}]
  %s3 = inlined_call_operand.hbm [shape: bf16[256,256], index: 3, kind: input, shape index: {}]
  %s4 = inlined_call_operand.vmem [shape: f32[1,256], index: 4, kind: input, shape index: {}]
  %s5 = inlined_call_operand.hbm [shape: bf16[256,256], index: 5, kind: input, shape index: {}]
  %s6 = inlined_call_operand.vmem [shape: f32[1,256], index: 6, kind: input, shape index: {}]
  %s7 = inlined_call_operand.hbm [shape: bf16[256,128], index: 7, kind: input, shape index: {}]
  %s8 = inlined_call_operand.vmem [shape: f32[1,128], index: 8, kind: input, shape index: {}]
  %s9 = inlined_call_operand.vmem [shape: bf16[16,128], index: 9, kind: output, shape index: {}]
  %s10 = sld [smem:[#allocation0]]
  $region66: #{dqn_forward.1} parent=0
    _
  %s12 = ssub.s32 1, %s10
  %s13 = scalar_select 0, %s12, %s10
  $region1: #{dqn_forward.1} parent=0
    #allocation2 [shape = 'u8[8192]{0}', space=vmem, size = 0x2000, scoped, tag = 'input window, operand 0, single buffered']
    #allocation3 [shape = 's32[1]{0}', space=sflag, size = 0x4, scoped, tag = 'scoped memory for dqn_forward.1']
    #allocation4 [shape = 'u8[16384]{0}', space=vmem, size = 0x4000, scoped, tag = 'input window, operand 1, single buffered']
    #allocation5 [shape = 's32[1]{0}', space=sflag, size = 0x4, scoped, tag = 'scoped memory for dqn_forward.1']
    #allocation6 [shape = 'u8[131072]{0}', space=vmem, size = 0x20000, scoped, tag = 'input window, operand 3, single buffered']
    #allocation7 [shape = 'u8[131072]{0}', space=vmem, size = 0x20000, scoped, tag = 'input window, operand 5, single buffered']
    #allocation8 [shape = 's32[1]{0}', space=sflag, size = 0x4, scoped, tag = 'scoped memory for dqn_forward.1']
    #allocation9 [shape = 'u8[65536]{0}', space=vmem, size = 0x10000, scoped, tag = 'input window, operand 7, single buffered']
    %14 = vsyncpa [#allocation3], 0
    %15 = vsyncpa [#allocation5], 0
    %16 = vsyncpa [#allocation8], 0
    // Predicated region
    $region2: #{dqn_forward.1} parent=1 // pred_check
      _
    $region3: #{dqn_forward.1} parent=1 // pred_check_branch
      %18 = sbr.rel (0) target = $region5
    $region4: #{dqn_forward.1} parent=1 // pred_region
      %s20 = ssub.s32 256, 256
      %21 = vsyncadd [#allocation3], %s20
      %s22 = sshll.u32 [#allocation2], 4
      %s23 = int_to_ptr.vmem [resolvable:$true] %s22
      %28 = dma.hbm_to_vmem [thread:$0]  %s0, 256, %s23, [#allocation3], 128, 128, 8
    $region5: #{dqn_forward.1} parent=1 // pred_fallthru
      _
    // Predicated region
    $region6: #{dqn_forward.1} parent=1 // pred_check
      _
    $region7: #{dqn_forward.1} parent=1 // pred_check_branch
      %30 = sbr.rel (0) target = $region9
    $region8: #{dqn_forward.1} parent=1 // pred_region
      %s32 = ssub.s32 512, 512
      %33 = vsyncadd [#allocation5], %s32
      %s34 = sshll.u32 [#allocation4], 4
      %s35 = int_to_ptr.vmem [resolvable:$true] %s34
      %40 = dma.hbm_to_vmem [thread:$0]  %s1, 512, %s35, [#allocation5], 128, 128, 8
    $region9: #{dqn_forward.1} parent=1 // pred_fallthru
      _
    // Predicated region
    $region10: #{dqn_forward.1} parent=1 // pred_check
      _
    $region11: #{dqn_forward.1} parent=1 // pred_check_branch
      %42 = sbr.rel (0) target = $region13
    $region12: #{dqn_forward.1} parent=1 // pred_region
      _
    $region13: #{dqn_forward.1} parent=1 // pred_fallthru
      _
    // Predicated region
    $region14: #{dqn_forward.1} parent=1 // pred_check
      _
    $region15: #{dqn_forward.1} parent=1 // pred_check_branch
      %44 = sbr.rel (0) target = $region17
    $region16: #{dqn_forward.1} parent=1 // pred_region
      %s46 = ssub.s32 4096, 4096
      %47 = vsyncadd [#allocation5], %s46
      %s48 = sshll.u32 [#allocation6], 4
      %s49 = int_to_ptr.vmem [resolvable:$true] %s48
      %54 = dma.hbm_to_vmem [thread:$0]  %s3, 4096, %s49, [#allocation5], 128, 128, 8
    $region17: #{dqn_forward.1} parent=1 // pred_fallthru
      _
    // Predicated region
    $region18: #{dqn_forward.1} parent=1 // pred_check
      _
    $region19: #{dqn_forward.1} parent=1 // pred_check_branch
      %56 = sbr.rel (0) target = $region21
    $region20: #{dqn_forward.1} parent=1 // pred_region
      _
    $region21: #{dqn_forward.1} parent=1 // pred_fallthru
      _
    // Predicated region
    $region22: #{dqn_forward.1} parent=1 // pred_check
      _
    $region23: #{dqn_forward.1} parent=1 // pred_check_branch
      %58 = sbr.rel (0) target = $region25
    $region24: #{dqn_forward.1} parent=1 // pred_region
      %s60 = ssub.s32 4096, 4096
      %61 = vsyncadd [#allocation8], %s60
      %s62 = sshll.u32 [#allocation7], 4
      %s63 = int_to_ptr.vmem [resolvable:$true] %s62
      %68 = dma.hbm_to_vmem [thread:$0]  %s5, 4096, %s63, [#allocation8], 128, 128, 8
    $region25: #{dqn_forward.1} parent=1 // pred_fallthru
      _
    // Predicated region
    $region26: #{dqn_forward.1} parent=1 // pred_check
      _
    $region27: #{dqn_forward.1} parent=1 // pred_check_branch
      %70 = sbr.rel (0) target = $region29
    $region28: #{dqn_forward.1} parent=1 // pred_region
      _
    $region29: #{dqn_forward.1} parent=1 // pred_fallthru
      _
    // Predicated region
    $region30: #{dqn_forward.1} parent=1 // pred_check
      _
    $region31: #{dqn_forward.1} parent=1 // pred_check_branch
      %72 = sbr.rel (0) target = $region33
    $region32: #{dqn_forward.1} parent=1 // pred_region
      %s74 = ssub.s32 2048, 2048
      %75 = vsyncadd [#allocation8], %s74
      %s76 = sshll.u32 [#allocation9], 4
      %s77 = int_to_ptr.vmem [resolvable:$true] %s76
      %82 = dma.hbm_to_vmem [thread:$0]  %s7, 2048, %s77, [#allocation8], 64, 64, 4
    $region33: #{dqn_forward.1} parent=1 // pred_fallthru
      _
    // Predicated region
    $region34: #{dqn_forward.1} parent=1 // pred_check
      _
    $region35: #{dqn_forward.1} parent=1 // pred_check_branch
      %84 = sbr.rel (0) target = $region37
    $region36: #{dqn_forward.1} parent=1 // pred_region
      _
    $region37: #{dqn_forward.1} parent=1 // pred_fallthru
      _
    // Predicated region
    $region38: #{dqn_forward.1} parent=1 // pred_check
      _
    $region39: #{dqn_forward.1} parent=1 // pred_check_branch
      %86 = sbr.rel (0) target = $region41
    $region40: #{dqn_forward.1} parent=1 // pred_region
      %87 = dma.done [#allocation3], 256
    $region41: #{dqn_forward.1} parent=1 // pred_fallthru
      _
    // Predicated region
    $region42: #{dqn_forward.1} parent=1 // pred_check
      _
    $region43: #{dqn_forward.1} parent=1 // pred_check_branch
      %89 = sbr.rel (0) target = $region45
    $region44: #{dqn_forward.1} parent=1 // pred_region
      %90 = dma.done [#allocation5], 512
    $region45: #{dqn_forward.1} parent=1 // pred_fallthru
      _
    // Predicated region
    $region46: #{dqn_forward.1} parent=1 // pred_check
      _
    $region47: #{dqn_forward.1} parent=1 // pred_check_branch
      %92 = sbr.rel (0) target = $region49
    $region48: #{dqn_forward.1} parent=1 // pred_region
      %93 = dma.done [#allocation5], 4096
    $region49: #{dqn_forward.1} parent=1 // pred_fallthru
      _
    // Predicated region
    $region50: #{dqn_forward.1} parent=1 // pred_check
      _
    $region51: #{dqn_forward.1} parent=1 // pred_check_branch
      %95 = sbr.rel (0) target = $region53
    $region52: #{dqn_forward.1} parent=1 // pred_region
      %96 = dma.done [#allocation8], 4096
    $region53: #{dqn_forward.1} parent=1 // pred_fallthru
      _
    // Predicated region
    $region54: #{dqn_forward.1} parent=1 // pred_check
      _
    $region55: #{dqn_forward.1} parent=1 // pred_check_branch
      %98 = sbr.rel (0) target = $region57
    $region56: #{dqn_forward.1} parent=1 // pred_region
      %99 = dma.done [#allocation8], 2048
    $region57: #{dqn_forward.1} parent=1 // pred_fallthru
      _
    %v101 = vld [vmem:[#allocation2] sm:$0xff]
    %v102 = vld [vmem:[#allocation2 + $0x8] sm:$0xff]
    %v103 = vpack.c.bf16 %v102, %v101
    %v104 = vld [vmem:[#allocation4] sm:$0xff]
    %v105 = vld [vmem:[#allocation4 + $0x8] sm:$0xff]
    %v106 = vld [vmem:[#allocation4 + $0x10] sm:$0xff]
    %v107 = vld [vmem:[#allocation4 + $0x18] sm:$0xff]
    %v108 = vld [vmem:[%s2] sm:$0x3]
    %v110 = vlaneseq
    %v111 = vshrl.u32 %v110, 7
    %v112 = vsub.s32 0, %v111
    %v113 = vrot.slane %v108, %v112
    %v114 = vlaneseq
    %v115 = vshrl.u32 %v114, 7
    %v116 = vsub.s32 1, %v115
    %v117 = vrot.slane %v108, %v116
    %v124 = vunpack.c.l.b16 %v104
    %v125 = vunpack.c.h.b16 %v104
    %v126 = vunpack.c.l.b16 %v105
    %v127 = vunpack.c.h.b16 %v105
    %v128 = vunpack.c.l.b16 %v106
    %v129 = vunpack.c.h.b16 %v106
    %v130 = vunpack.c.l.b16 %v107
    %v131 = vunpack.c.h.b16 %v107
    %v132 = vpack.c.b16 %v126, %v124
    %v133 = vpack.c.b16 %v127, %v125
    %v134 = vpack.c.b16 %v130, %v128
    %v135 = vpack.c.b16 %v131, %v129
    %vm140 = vcmask 261120
    %v142 = vsel %vm140, %v103, 0
    %144 = vmatprep.subr.bf16.mxu0 %v133
    %145 = vmatpush1.bf16.msra.mxu0 %v132
    %146 = vmatprep.subr.bf16.mxu0 %v135
    %147 = vmatpush1.bf16.msra.mxu0 %v134
    %148 = vmatprep.subr.bf16.mxu0 0
    %149 = vmatpush1.bf16.msra.mxu0 0
    %150 = vmatprep.subr.bf16.mxu0 0
    %151 = vmatpush1.bf16.msra.mxu0 0
    %152 = vmatprep.subr.bf16.mxu0 0
    %153 = vmatpush1.bf16.msra.mxu0 0
    %154 = vmatprep.subr.bf16.mxu0 0
    %155 = vmatpush1.bf16.msra.mxu0 0
    %156 = vmatprep.subr.bf16.mxu0 0
    %157 = vmatpush1.bf16.msra.mxu0 0
    %158 = vmatprep.subr.bf16.mxu0 0
    %159 = vmatpush1.bf16.msra.mxu0 0
    %160 = vmatprep.subr.bf16.mxu0 0
    %161 = vmatpush1.bf16.msra.mxu0 0
    %162 = vmatprep.subr.bf16.mxu0 0
    %163 = vmatpush1.bf16.msra.mxu0 0
    %164 = vmatprep.subr.bf16.mxu0 0
    %165 = vmatpush1.bf16.msra.mxu0 0
    %166 = vmatprep.subr.bf16.mxu0 0
    %167 = vmatpush1.bf16.msra.mxu0 0
    %168 = vmatprep.subr.bf16.mxu0 0
    %169 = vmatpush1.bf16.msra.mxu0 0
    %170 = vmatprep.subr.bf16.mxu0 0
    %171 = vmatpush1.bf16.msra.mxu0 0
    %172 = vmatprep.subr.bf16.mxu0 0
    %173 = vmatpush1.bf16.msra.mxu0 0
    %174 = vmatprep.subr.bf16.mxu0 0
    %175 = vmatpush1.bf16.msra.mxu0 0
    %176 = vmatprep.mubr.bf16.mxu0 0
    %177 = vmatmul.mubr.bf16.gmra.mrb[0].mxu0 %v142
    %v178 = vpop.f32.mrb[0].mxu0
    %v179 = vadd.f32 %v113, %v178
    %v180 = vpop.f32.mrb[0].mxu0
    %v181 = vadd.f32 %v117, %v180
    %v182 = vpop.f32.mrb[0].mxu0
    %v183 = vadd.f32 %v113, %v182
    %v184 = vpop.f32.mrb[0].mxu0
    %v185 = vadd.f32 %v117, %v184
    %186 = vdwg.mxu0
    %v187 = vmax.f32 %v179, 0.0
    %v188 = vmax.f32 %v181, 0.0
    %v189 = vmax.f32 %v183, 0.0
    %v190 = vmax.f32 %v185, 0.0
    %v191 = vpack.c.bf16 %v189, %v187
    %v192 = vpack.c.bf16 %v190, %v188
    %v193 = vld [vmem:[#allocation6] sm:$0xff]
    %v194 = vld [vmem:[#allocation6 + $0x8] sm:$0xff]
    %v195 = vld [vmem:[#allocation6 + $0x10] sm:$0xff]
    %v196 = vld [vmem:[#allocation6 + $0x18] sm:$0xff]
    %v197 = vld [vmem:[#allocation6 + $0x20] sm:$0xff]
    %v198 = vld [vmem:[#allocation6 + $0x28] sm:$0xff]
    %v199 = vld [vmem:[#allocation6 + $0x30] sm:$0xff]
    %v200 = vld [vmem:[#allocation6 + $0x38] sm:$0xff]
    %v201 = vld [vmem:[#allocation6 + $0x40] sm:$0xff]
    %v202 = vld [vmem:[#allocation6 + $0x48] sm:$0xff]
    %v203 = vld [vmem:[#allocation6 + $0x50] sm:$0xff]
    %v204 = vld [vmem:[#allocation6 + $0x58] sm:$0xff]
    %v205 = vld [vmem:[#allocation6 + $0x60] sm:$0xff]
    %v206 = vld [vmem:[#allocation6 + $0x68] sm:$0xff]
    %v207 = vld [vmem:[#allocation6 + $0x70] sm:$0xff]
    %v208 = vld [vmem:[#allocation6 + $0x78] sm:$0xff]
    %v209 = vld [vmem:[#allocation6 + $0x80] sm:$0xff]
    %v210 = vld [vmem:[#allocation6 + $0x88] sm:$0xff]
    %v211 = vld [vmem:[#allocation6 + $0x90] sm:$0xff]
    %v212 = vld [vmem:[#allocation6 + $0x98] sm:$0xff]
    %v213 = vld [vmem:[#allocation6 + $0xa0] sm:$0xff]
    %v214 = vld [vmem:[#allocation6 + $0xa8] sm:$0xff]
    %v215 = vld [vmem:[#allocation6 + $0xb0] sm:$0xff]
    %v216 = vld [vmem:[#allocation6 + $0xb8] sm:$0xff]
    %v217 = vld [vmem:[#allocation6 + $0xc0] sm:$0xff]
    %v218 = vld [vmem:[#allocation6 + $0xc8] sm:$0xff]
    %v219 = vld [vmem:[#allocation6 + $0xd0] sm:$0xff]
    %v220 = vld [vmem:[#allocation6 + $0xd8] sm:$0xff]
    %v221 = vld [vmem:[#allocation6 + $0xe0] sm:$0xff]
    %v222 = vld [vmem:[#allocation6 + $0xe8] sm:$0xff]
    %v223 = vld [vmem:[#allocation6 + $0xf0] sm:$0xff]
    %v224 = vld [vmem:[#allocation6 + $0xf8] sm:$0xff]
    %v225 = vld [vmem:[%s4] sm:$0x3]
    %v227 = vlaneseq
    %v228 = vshrl.u32 %v227, 7
    %v229 = vsub.s32 0, %v228
    %v230 = vrot.slane %v225, %v229
    %v231 = vlaneseq
    %v232 = vshrl.u32 %v231, 7
    %v233 = vsub.s32 1, %v232
    %v234 = vrot.slane %v225, %v233
    %v269 = vunpack.c.l.b16 %v193
    %v270 = vunpack.c.h.b16 %v193
    %v271 = vunpack.c.l.b16 %v194
    %v272 = vunpack.c.h.b16 %v194
    %v273 = vunpack.c.l.b16 %v195
    %v274 = vunpack.c.h.b16 %v195
    %v275 = vunpack.c.l.b16 %v196
    %v276 = vunpack.c.h.b16 %v196
    %v277 = vunpack.c.l.b16 %v197
    %v278 = vunpack.c.h.b16 %v197
    %v279 = vunpack.c.l.b16 %v198
    %v280 = vunpack.c.h.b16 %v198
    %v281 = vunpack.c.l.b16 %v199
    %v282 = vunpack.c.h.b16 %v199
    %v283 = vunpack.c.l.b16 %v200
    %v284 = vunpack.c.h.b16 %v200
    %v285 = vunpack.c.l.b16 %v201
    %v286 = vunpack.c.h.b16 %v201
    %v287 = vunpack.c.l.b16 %v202
    %v288 = vunpack.c.h.b16 %v202
    %v289 = vunpack.c.l.b16 %v203
    %v290 = vunpack.c.h.b16 %v203
    %v291 = vunpack.c.l.b16 %v204
    %v292 = vunpack.c.h.b16 %v204
    %v293 = vunpack.c.l.b16 %v205
    %v294 = vunpack.c.h.b16 %v205
    %v295 = vunpack.c.l.b16 %v206
    %v296 = vunpack.c.h.b16 %v206
    %v297 = vunpack.c.l.b16 %v207
    %v298 = vunpack.c.h.b16 %v207
    %v299 = vunpack.c.l.b16 %v208
    %v300 = vunpack.c.h.b16 %v208
    %v301 = vunpack.c.l.b16 %v209
    %v302 = vunpack.c.h.b16 %v209
    %v303 = vunpack.c.l.b16 %v210
    %v304 = vunpack.c.h.b16 %v210
    %v305 = vunpack.c.l.b16 %v211
    %v306 = vunpack.c.h.b16 %v211
    %v307 = vunpack.c.l.b16 %v212
    %v308 = vunpack.c.h.b16 %v212
    %v309 = vunpack.c.l.b16 %v213
    %v310 = vunpack.c.h.b16 %v213
    %v311 = vunpack.c.l.b16 %v214
    %v312 = vunpack.c.h.b16 %v214
    %v313 = vunpack.c.l.b16 %v215
    %v314 = vunpack.c.h.b16 %v215
    %v315 = vunpack.c.l.b16 %v216
    %v316 = vunpack.c.h.b16 %v216
    %v317 = vunpack.c.l.b16 %v217
    %v318 = vunpack.c.h.b16 %v217
    %v319 = vunpack.c.l.b16 %v218
    %v320 = vunpack.c.h.b16 %v218
    %v321 = vunpack.c.l.b16 %v219
    %v322 = vunpack.c.h.b16 %v219
    %v323 = vunpack.c.l.b16 %v220
    %v324 = vunpack.c.h.b16 %v220
    %v325 = vunpack.c.l.b16 %v221
    %v326 = vunpack.c.h.b16 %v221
    %v327 = vunpack.c.l.b16 %v222
    %v328 = vunpack.c.h.b16 %v222
    %v329 = vunpack.c.l.b16 %v223
    %v330 = vunpack.c.h.b16 %v223
    %v331 = vunpack.c.l.b16 %v224
    %v332 = vunpack.c.h.b16 %v224
    %v333 = vpack.c.b16 %v271, %v269
    %v334 = vpack.c.b16 %v272, %v270
    %v335 = vpack.c.b16 %v275, %v273
    %v336 = vpack.c.b16 %v276, %v274
    %v337 = vpack.c.b16 %v279, %v277
    %v338 = vpack.c.b16 %v280, %v278
    %v339 = vpack.c.b16 %v283, %v281
    %v340 = vpack.c.b16 %v284, %v282
    %v341 = vpack.c.b16 %v287, %v285
    %v342 = vpack.c.b16 %v288, %v286
    %v343 = vpack.c.b16 %v291, %v289
    %v344 = vpack.c.b16 %v292, %v290
    %v345 = vpack.c.b16 %v295, %v293
    %v346 = vpack.c.b16 %v296, %v294
    %v347 = vpack.c.b16 %v299, %v297
    %v348 = vpack.c.b16 %v300, %v298
    %v349 = vpack.c.b16 %v303, %v301
    %v350 = vpack.c.b16 %v304, %v302
    %v351 = vpack.c.b16 %v307, %v305
    %v352 = vpack.c.b16 %v308, %v306
    %v353 = vpack.c.b16 %v311, %v309
    %v354 = vpack.c.b16 %v312, %v310
    %v355 = vpack.c.b16 %v315, %v313
    %v356 = vpack.c.b16 %v316, %v314
    %v357 = vpack.c.b16 %v319, %v317
    %v358 = vpack.c.b16 %v320, %v318
    %v359 = vpack.c.b16 %v323, %v321
    %v360 = vpack.c.b16 %v324, %v322
    %v361 = vpack.c.b16 %v327, %v325
    %v362 = vpack.c.b16 %v328, %v326
    %v363 = vpack.c.b16 %v331, %v329
    %v364 = vpack.c.b16 %v332, %v330
    %397 = vmatprep.subr.bf16.mxu0 %v334
    %398 = vmatpush1.bf16.msra.mxu0 %v333
    %399 = vmatprep.subr.bf16.mxu0 %v336
    %400 = vmatpush1.bf16.msra.mxu0 %v335
    %401 = vmatprep.subr.bf16.mxu0 %v338
    %402 = vmatpush1.bf16.msra.mxu0 %v337
    %403 = vmatprep.subr.bf16.mxu0 %v340
    %404 = vmatpush1.bf16.msra.mxu0 %v339
    %405 = vmatprep.subr.bf16.mxu0 %v342
    %406 = vmatpush1.bf16.msra.mxu0 %v341
    %407 = vmatprep.subr.bf16.mxu0 %v344
    %408 = vmatpush1.bf16.msra.mxu0 %v343
    %409 = vmatprep.subr.bf16.mxu0 %v346
    %410 = vmatpush1.bf16.msra.mxu0 %v345
    %411 = vmatprep.subr.bf16.mxu0 %v348
    %412 = vmatpush1.bf16.msra.mxu0 %v347
    %413 = vmatprep.subr.bf16.mxu0 %v350
    %414 = vmatpush1.bf16.msra.mxu0 %v349
    %415 = vmatprep.subr.bf16.mxu0 %v352
    %416 = vmatpush1.bf16.msra.mxu0 %v351
    %417 = vmatprep.subr.bf16.mxu0 %v354
    %418 = vmatpush1.bf16.msra.mxu0 %v353
    %419 = vmatprep.subr.bf16.mxu0 %v356
    %420 = vmatpush1.bf16.msra.mxu0 %v355
    %421 = vmatprep.subr.bf16.mxu0 %v358
    %422 = vmatpush1.bf16.msra.mxu0 %v357
    %423 = vmatprep.subr.bf16.mxu0 %v360
    %424 = vmatpush1.bf16.msra.mxu0 %v359
    %425 = vmatprep.subr.bf16.mxu0 %v362
    %426 = vmatpush1.bf16.msra.mxu0 %v361
    %427 = vmatprep.subr.bf16.mxu0 %v364
    %428 = vmatpush1.bf16.msra.mxu0 %v363
    %429 = vmatprep.mubr.bf16.mxu0 %v192
    %430 = vmatmul.mubr.bf16.gmra.mrb[0].mxu0 %v191
    %v431 = vpop.f32.mrb[0].mxu0
    %v432 = vadd.f32 %v230, %v431
    %v433 = vpop.f32.mrb[0].mxu0
    %v434 = vadd.f32 %v234, %v433
    %v435 = vpop.f32.mrb[0].mxu0
    %v436 = vadd.f32 %v230, %v435
    %v437 = vpop.f32.mrb[0].mxu0
    %v438 = vadd.f32 %v234, %v437
    %439 = vdwg.mxu0
    %v440 = vmax.f32 %v432, 0.0
    %v441 = vmax.f32 %v434, 0.0
    %v442 = vmax.f32 %v436, 0.0
    %v443 = vmax.f32 %v438, 0.0
    %v444 = vpack.c.bf16 %v442, %v440
    %v445 = vpack.c.bf16 %v443, %v441
    %v446 = vld [vmem:[#allocation7] sm:$0xff]
    %v447 = vld [vmem:[#allocation7 + $0x8] sm:$0xff]
    %v448 = vld [vmem:[#allocation7 + $0x10] sm:$0xff]
    %v449 = vld [vmem:[#allocation7 + $0x18] sm:$0xff]
    %v450 = vld [vmem:[#allocation7 + $0x20] sm:$0xff]
    %v451 = vld [vmem:[#allocation7 + $0x28] sm:$0xff]
    %v452 = vld [vmem:[#allocation7 + $0x30] sm:$0xff]
    %v453 = vld [vmem:[#allocation7 + $0x38] sm:$0xff]
    %v454 = vld [vmem:[#allocation7 + $0x40] sm:$0xff]
    %v455 = vld [vmem:[#allocation7 + $0x48] sm:$0xff]
    %v456 = vld [vmem:[#allocation7 + $0x50] sm:$0xff]
    %v457 = vld [vmem:[#allocation7 + $0x58] sm:$0xff]
    %v458 = vld [vmem:[#allocation7 + $0x60] sm:$0xff]
    %v459 = vld [vmem:[#allocation7 + $0x68] sm:$0xff]
    %v460 = vld [vmem:[#allocation7 + $0x70] sm:$0xff]
    %v461 = vld [vmem:[#allocation7 + $0x78] sm:$0xff]
    %v462 = vld [vmem:[#allocation7 + $0x80] sm:$0xff]
    %v463 = vld [vmem:[#allocation7 + $0x88] sm:$0xff]
    %v464 = vld [vmem:[#allocation7 + $0x90] sm:$0xff]
    %v465 = vld [vmem:[#allocation7 + $0x98] sm:$0xff]
    %v466 = vld [vmem:[#allocation7 + $0xa0] sm:$0xff]
    %v467 = vld [vmem:[#allocation7 + $0xa8] sm:$0xff]
    %v468 = vld [vmem:[#allocation7 + $0xb0] sm:$0xff]
    %v469 = vld [vmem:[#allocation7 + $0xb8] sm:$0xff]
    %v470 = vld [vmem:[#allocation7 + $0xc0] sm:$0xff]
    %v471 = vld [vmem:[#allocation7 + $0xc8] sm:$0xff]
    %v472 = vld [vmem:[#allocation7 + $0xd0] sm:$0xff]
    %v473 = vld [vmem:[#allocation7 + $0xd8] sm:$0xff]
    %v474 = vld [vmem:[#allocation7 + $0xe0] sm:$0xff]
    %v475 = vld [vmem:[#allocation7 + $0xe8] sm:$0xff]
    %v476 = vld [vmem:[#allocation7 + $0xf0] sm:$0xff]
    %v477 = vld [vmem:[#allocation7 + $0xf8] sm:$0xff]
    %v478 = vld [vmem:[%s6] sm:$0x3]
    %v480 = vlaneseq
    %v481 = vshrl.u32 %v480, 7
    %v482 = vsub.s32 0, %v481
    %v483 = vrot.slane %v478, %v482
    %v484 = vlaneseq
    %v485 = vshrl.u32 %v484, 7
    %v486 = vsub.s32 1, %v485
    %v487 = vrot.slane %v478, %v486
    %v522 = vunpack.c.l.b16 %v446
    %v523 = vunpack.c.h.b16 %v446
    %v524 = vunpack.c.l.b16 %v447
    %v525 = vunpack.c.h.b16 %v447
    %v526 = vunpack.c.l.b16 %v448
    %v527 = vunpack.c.h.b16 %v448
    %v528 = vunpack.c.l.b16 %v449
    %v529 = vunpack.c.h.b16 %v449
    %v530 = vunpack.c.l.b16 %v450
    %v531 = vunpack.c.h.b16 %v450
    %v532 = vunpack.c.l.b16 %v451
    %v533 = vunpack.c.h.b16 %v451
    %v534 = vunpack.c.l.b16 %v452
    %v535 = vunpack.c.h.b16 %v452
    %v536 = vunpack.c.l.b16 %v453
    %v537 = vunpack.c.h.b16 %v453
    %v538 = vunpack.c.l.b16 %v454
    %v539 = vunpack.c.h.b16 %v454
    %v540 = vunpack.c.l.b16 %v455
    %v541 = vunpack.c.h.b16 %v455
    %v542 = vunpack.c.l.b16 %v456
    %v543 = vunpack.c.h.b16 %v456
    %v544 = vunpack.c.l.b16 %v457
    %v545 = vunpack.c.h.b16 %v457
    %v546 = vunpack.c.l.b16 %v458
    %v547 = vunpack.c.h.b16 %v458
    %v548 = vunpack.c.l.b16 %v459
    %v549 = vunpack.c.h.b16 %v459
    %v550 = vunpack.c.l.b16 %v460
    %v551 = vunpack.c.h.b16 %v460
    %v552 = vunpack.c.l.b16 %v461
    %v553 = vunpack.c.h.b16 %v461
    %v554 = vunpack.c.l.b16 %v462
    %v555 = vunpack.c.h.b16 %v462
    %v556 = vunpack.c.l.b16 %v463
    %v557 = vunpack.c.h.b16 %v463
    %v558 = vunpack.c.l.b16 %v464
    %v559 = vunpack.c.h.b16 %v464
    %v560 = vunpack.c.l.b16 %v465
    %v561 = vunpack.c.h.b16 %v465
    %v562 = vunpack.c.l.b16 %v466
    %v563 = vunpack.c.h.b16 %v466
    %v564 = vunpack.c.l.b16 %v467
    %v565 = vunpack.c.h.b16 %v467
    %v566 = vunpack.c.l.b16 %v468
    %v567 = vunpack.c.h.b16 %v468
    %v568 = vunpack.c.l.b16 %v469
    %v569 = vunpack.c.h.b16 %v469
    %v570 = vunpack.c.l.b16 %v470
    %v571 = vunpack.c.h.b16 %v470
    %v572 = vunpack.c.l.b16 %v471
    %v573 = vunpack.c.h.b16 %v471
    %v574 = vunpack.c.l.b16 %v472
    %v575 = vunpack.c.h.b16 %v472
    %v576 = vunpack.c.l.b16 %v473
    %v577 = vunpack.c.h.b16 %v473
    %v578 = vunpack.c.l.b16 %v474
    %v579 = vunpack.c.h.b16 %v474
    %v580 = vunpack.c.l.b16 %v475
    %v581 = vunpack.c.h.b16 %v475
    %v582 = vunpack.c.l.b16 %v476
    %v583 = vunpack.c.h.b16 %v476
    %v584 = vunpack.c.l.b16 %v477
    %v585 = vunpack.c.h.b16 %v477
    %v586 = vpack.c.b16 %v524, %v522
    %v587 = vpack.c.b16 %v525, %v523
    %v588 = vpack.c.b16 %v528, %v526
    %v589 = vpack.c.b16 %v529, %v527
    %v590 = vpack.c.b16 %v532, %v530
    %v591 = vpack.c.b16 %v533, %v531
    %v592 = vpack.c.b16 %v536, %v534
    %v593 = vpack.c.b16 %v537, %v535
    %v594 = vpack.c.b16 %v540, %v538
    %v595 = vpack.c.b16 %v541, %v539
    %v596 = vpack.c.b16 %v544, %v542
    %v597 = vpack.c.b16 %v545, %v543
    %v598 = vpack.c.b16 %v548, %v546
    %v599 = vpack.c.b16 %v549, %v547
    %v600 = vpack.c.b16 %v552, %v550
    %v601 = vpack.c.b16 %v553, %v551
    %v602 = vpack.c.b16 %v556, %v554
    %v603 = vpack.c.b16 %v557, %v555
    %v604 = vpack.c.b16 %v560, %v558
    %v605 = vpack.c.b16 %v561, %v559
    %v606 = vpack.c.b16 %v564, %v562
    %v607 = vpack.c.b16 %v565, %v563
    %v608 = vpack.c.b16 %v568, %v566
    %v609 = vpack.c.b16 %v569, %v567
    %v610 = vpack.c.b16 %v572, %v570
    %v611 = vpack.c.b16 %v573, %v571
    %v612 = vpack.c.b16 %v576, %v574
    %v613 = vpack.c.b16 %v577, %v575
    %v614 = vpack.c.b16 %v580, %v578
    %v615 = vpack.c.b16 %v581, %v579
    %v616 = vpack.c.b16 %v584, %v582
    %v617 = vpack.c.b16 %v585, %v583
    %650 = vmatprep.subr.bf16.mxu0 %v587
    %651 = vmatpush1.bf16.msra.mxu0 %v586
    %652 = vmatprep.subr.bf16.mxu0 %v589
    %653 = vmatpush1.bf16.msra.mxu0 %v588
    %654 = vmatprep.subr.bf16.mxu0 %v591
    %655 = vmatpush1.bf16.msra.mxu0 %v590
    %656 = vmatprep.subr.bf16.mxu0 %v593
    %657 = vmatpush1.bf16.msra.mxu0 %v592
    %658 = vmatprep.subr.bf16.mxu0 %v595
    %659 = vmatpush1.bf16.msra.mxu0 %v594
    %660 = vmatprep.subr.bf16.mxu0 %v597
    %661 = vmatpush1.bf16.msra.mxu0 %v596
    %662 = vmatprep.subr.bf16.mxu0 %v599
    %663 = vmatpush1.bf16.msra.mxu0 %v598
    %664 = vmatprep.subr.bf16.mxu0 %v601
    %665 = vmatpush1.bf16.msra.mxu0 %v600
    %666 = vmatprep.subr.bf16.mxu0 %v603
    %667 = vmatpush1.bf16.msra.mxu0 %v602
    %668 = vmatprep.subr.bf16.mxu0 %v605
    %669 = vmatpush1.bf16.msra.mxu0 %v604
    %670 = vmatprep.subr.bf16.mxu0 %v607
    %671 = vmatpush1.bf16.msra.mxu0 %v606
    %672 = vmatprep.subr.bf16.mxu0 %v609
    %673 = vmatpush1.bf16.msra.mxu0 %v608
    %674 = vmatprep.subr.bf16.mxu0 %v611
    %675 = vmatpush1.bf16.msra.mxu0 %v610
    %676 = vmatprep.subr.bf16.mxu0 %v613
    %677 = vmatpush1.bf16.msra.mxu0 %v612
    %678 = vmatprep.subr.bf16.mxu0 %v615
    %679 = vmatpush1.bf16.msra.mxu0 %v614
    %680 = vmatprep.subr.bf16.mxu0 %v617
    %681 = vmatpush1.bf16.msra.mxu0 %v616
    %682 = vmatprep.mubr.bf16.mxu0 %v445
    %683 = vmatmul.mubr.bf16.gmra.mrb[0].mxu0 %v444
    %v684 = vpop.f32.mrb[0].mxu0
    %v685 = vadd.f32 %v483, %v684
    %v686 = vpop.f32.mrb[0].mxu0
    %v687 = vadd.f32 %v487, %v686
    %v688 = vpop.f32.mrb[0].mxu0
    %v689 = vadd.f32 %v483, %v688
    %v690 = vpop.f32.mrb[0].mxu0
    %v691 = vadd.f32 %v487, %v690
    %692 = vdwg.mxu0
    %v693 = vmax.f32 %v685, 0.0
    %v694 = vmax.f32 %v687, 0.0
    %v695 = vmax.f32 %v689, 0.0
    %v696 = vmax.f32 %v691, 0.0
    %v697 = vpack.c.bf16 %v695, %v693
    %v698 = vpack.c.bf16 %v696, %v694
    %v699 = vld [vmem:[#allocation9] sm:$0xf]
    %v700 = vld [vmem:[#allocation9 + $0x4] sm:$0xf]
    %v701 = vld [vmem:[#allocation9 + $0x8] sm:$0xf]
    %v702 = vld [vmem:[#allocation9 + $0xc] sm:$0xf]
    %v703 = vld [vmem:[#allocation9 + $0x10] sm:$0xf]
    %v704 = vld [vmem:[#allocation9 + $0x14] sm:$0xf]
    %v705 = vld [vmem:[#allocation9 + $0x18] sm:$0xf]
    %v706 = vld [vmem:[#allocation9 + $0x1c] sm:$0xf]
    %v707 = vld [vmem:[#allocation9 + $0x20] sm:$0xf]
    %v708 = vld [vmem:[#allocation9 + $0x24] sm:$0xf]
    %v709 = vld [vmem:[#allocation9 + $0x28] sm:$0xf]
    %v710 = vld [vmem:[#allocation9 + $0x2c] sm:$0xf]
    %v711 = vld [vmem:[#allocation9 + $0x30] sm:$0xf]
    %v712 = vld [vmem:[#allocation9 + $0x34] sm:$0xf]
    %v713 = vld [vmem:[#allocation9 + $0x38] sm:$0xf]
    %v714 = vld [vmem:[#allocation9 + $0x3c] sm:$0xf]
    %v715 = vld [vmem:[#allocation9 + $0x40] sm:$0xf]
    %v716 = vld [vmem:[#allocation9 + $0x44] sm:$0xf]
    %v717 = vld [vmem:[#allocation9 + $0x48] sm:$0xf]
    %v718 = vld [vmem:[#allocation9 + $0x4c] sm:$0xf]
    %v719 = vld [vmem:[#allocation9 + $0x50] sm:$0xf]
    %v720 = vld [vmem:[#allocation9 + $0x54] sm:$0xf]
    %v721 = vld [vmem:[#allocation9 + $0x58] sm:$0xf]
    %v722 = vld [vmem:[#allocation9 + $0x5c] sm:$0xf]
    %v723 = vld [vmem:[#allocation9 + $0x60] sm:$0xf]
    %v724 = vld [vmem:[#allocation9 + $0x64] sm:$0xf]
    %v725 = vld [vmem:[#allocation9 + $0x68] sm:$0xf]
    %v726 = vld [vmem:[#allocation9 + $0x6c] sm:$0xf]
    %v727 = vld [vmem:[#allocation9 + $0x70] sm:$0xf]
    %v728 = vld [vmem:[#allocation9 + $0x74] sm:$0xf]
    %v729 = vld [vmem:[#allocation9 + $0x78] sm:$0xf]
    %v730 = vld [vmem:[#allocation9 + $0x7c] sm:$0xf]
    %v731 = vld [vmem:[%s8] sm:$0x1]
    %v733 = vlaneseq
    %v734 = vshrl.u32 %v733, 7
    %v735 = vsub.s32 0, %v734
    %v736 = vrot.slane %v731, %v735
    %v770 = vunpack.c.l.b16 %v699
    %v771 = vunpack.c.l.b16 %v700
    %v772 = vunpack.c.l.b16 %v701
    %v773 = vunpack.c.l.b16 %v702
    %v774 = vunpack.c.l.b16 %v703
    %v775 = vunpack.c.l.b16 %v704
    %v776 = vunpack.c.l.b16 %v705
    %v777 = vunpack.c.l.b16 %v706
    %v778 = vunpack.c.l.b16 %v707
    %v779 = vunpack.c.l.b16 %v708
    %v780 = vunpack.c.l.b16 %v709
    %v781 = vunpack.c.l.b16 %v710
    %v782 = vunpack.c.l.b16 %v711
    %v783 = vunpack.c.l.b16 %v712
    %v784 = vunpack.c.l.b16 %v713
    %v785 = vunpack.c.l.b16 %v714
    %v786 = vunpack.c.l.b16 %v715
    %v787 = vunpack.c.l.b16 %v716
    %v788 = vunpack.c.l.b16 %v717
    %v789 = vunpack.c.l.b16 %v718
    %v790 = vunpack.c.l.b16 %v719
    %v791 = vunpack.c.l.b16 %v720
    %v792 = vunpack.c.l.b16 %v721
    %v793 = vunpack.c.l.b16 %v722
    %v794 = vunpack.c.l.b16 %v723
    %v795 = vunpack.c.l.b16 %v724
    %v796 = vunpack.c.l.b16 %v725
    %v797 = vunpack.c.l.b16 %v726
    %v798 = vunpack.c.l.b16 %v727
    %v799 = vunpack.c.l.b16 %v728
    %v800 = vunpack.c.l.b16 %v729
    %v801 = vunpack.c.l.b16 %v730
    %v802 = vpack.c.b16 %v771, %v770
    %v803 = vpack.c.b16 %v773, %v772
    %v804 = vpack.c.b16 %v775, %v774
    %v805 = vpack.c.b16 %v777, %v776
    %v806 = vpack.c.b16 %v779, %v778
    %v807 = vpack.c.b16 %v781, %v780
    %v808 = vpack.c.b16 %v783, %v782
    %v809 = vpack.c.b16 %v785, %v784
    %v810 = vpack.c.b16 %v787, %v786
    %v811 = vpack.c.b16 %v789, %v788
    %v812 = vpack.c.b16 %v791, %v790
    %v813 = vpack.c.b16 %v793, %v792
    %v814 = vpack.c.b16 %v795, %v794
    %v815 = vpack.c.b16 %v797, %v796
    %v816 = vpack.c.b16 %v799, %v798
    %v817 = vpack.c.b16 %v801, %v800
    %834 = vmatprep.subr.bf16.mxu0 0
    %835 = vmatpush1.bf16.msra.mxu0 %v802
    %836 = vmatprep.subr.bf16.mxu0 0
    %837 = vmatpush1.bf16.msra.mxu0 %v803
    %838 = vmatprep.subr.bf16.mxu0 0
    %839 = vmatpush1.bf16.msra.mxu0 %v804
    %840 = vmatprep.subr.bf16.mxu0 0
    %841 = vmatpush1.bf16.msra.mxu0 %v805
    %842 = vmatprep.subr.bf16.mxu0 0
    %843 = vmatpush1.bf16.msra.mxu0 %v806
    %844 = vmatprep.subr.bf16.mxu0 0
    %845 = vmatpush1.bf16.msra.mxu0 %v807
    %846 = vmatprep.subr.bf16.mxu0 0
    %847 = vmatpush1.bf16.msra.mxu0 %v808
    %848 = vmatprep.subr.bf16.mxu0 0
    %849 = vmatpush1.bf16.msra.mxu0 %v809
    %850 = vmatprep.subr.bf16.mxu0 0
    %851 = vmatpush1.bf16.msra.mxu0 %v810
    %852 = vmatprep.subr.bf16.mxu0 0
    %853 = vmatpush1.bf16.msra.mxu0 %v811
    %854 = vmatprep.subr.bf16.mxu0 0
    %855 = vmatpush1.bf16.msra.mxu0 %v812
    %856 = vmatprep.subr.bf16.mxu0 0
    %857 = vmatpush1.bf16.msra.mxu0 %v813
    %858 = vmatprep.subr.bf16.mxu0 0
    %859 = vmatpush1.bf16.msra.mxu0 %v814
    %860 = vmatprep.subr.bf16.mxu0 0
    %861 = vmatpush1.bf16.msra.mxu0 %v815
    %862 = vmatprep.subr.bf16.mxu0 0
    %863 = vmatpush1.bf16.msra.mxu0 %v816
    %864 = vmatprep.subr.bf16.mxu0 0
    %865 = vmatpush1.bf16.msra.mxu0 %v817
    %866 = vmatprep.mubr.bf16.mxu0 %v698
    %867 = vmatmul.mubr.bf16.gmra.mrb[0].mxu0 %v697
    %v868 = vpop.f32.mrb[0].mxu0
    %v869 = vadd.f32 %v736, %v868
    %v870 = vpop.f32.mrb[0].mxu0
    %v871 = vpop.f32.mrb[0].mxu0
    %v872 = vadd.f32 %v736, %v871
    %v873 = vpop.f32.mrb[0].mxu0
    %874 = vdwg.mxu0
    %v875 = vpack.c.bf16 %v872, %v869
    %v877 = vunpack.c.l.b16 %v875
    %v878 = vunpack.c.h.b16 %v875
    %v879 = vpack.c.b16 %v877, %v877
    %v880 = vpack.c.b16 %v878, %v878
    %883 = vst [vmem:[%s9] sm:$0xf] %v879
    %884 = vst [vmem:[%s9 + $0x4] sm:$0xf] %v880
    // Predicated region
    $region58: #{dqn_forward.1} parent=1 // pred_check
      _
    $region59: #{dqn_forward.1} parent=1 // pred_check_branch
      %886 = sbr.rel (0) target = $region61
    $region60: #{dqn_forward.1} parent=1 // pred_region
      _
    $region61: #{dqn_forward.1} parent=1 // pred_fallthru
      _
    // Predicated region
    $region62: #{dqn_forward.1} parent=1 // pred_check
      _
    $region63: #{dqn_forward.1} parent=1 // pred_check_branch
      %888 = sbr.rel (0) target = $region65
    $region64: #{dqn_forward.1} parent=1 // pred_region
      _
    $region65: #{dqn_forward.1} parent=1 // pred_fallthru
      _
    %889 = vsyncpa [#allocation3], 1
    %890 = vsyncpa [#allocation5], 1
    %891 = vsyncpa [#allocation8], 1

</llo_original>
